<compile_context>
chip_gen: v6e
topology: v6e:2x2x1
jax: 0.10.0
libtpu: 0.0.40
codegen_flags: <defaults>
</compile_context>

<pallas_src>
import functools

import jax
import jax.numpy as jnp
from jax.experimental import pallas as pl
from jax.experimental.pallas import tpu as pltpu


def _label_smoothing_kernel(target_ref, pred_ref, out_ref, *,
                            off_value, confidence, n_rows, tile_n):
    i = pl.program_id(0)

    x = pred_ref[...].astype(jnp.float32)                  # (tn, C), f32 math
    tn, n_cls = x.shape

    # Numerically-stable logsumexp along the class (lane) axis.
    m = jnp.max(x, axis=-1, keepdims=True)                  # (tn, 1)
    lse = jnp.log(jnp.sum(jnp.exp(x - m), axis=-1, keepdims=True)) + m

    # Fused reduction: sum_c(true_dist) == 1, so
    #   row_loss = sum_c(-true_dist * (x - lse)) = lse - sum_c(weight * x)
    # with weight = off_value everywhere, confidence at the target class.
    ids = jax.lax.broadcasted_iota(jnp.int32, (tn, n_cls), 1)
    tgt = target_ref[...]                                    # (tn, 1) int32
    w = jnp.where(ids == tgt, confidence, off_value)         # (tn, C)
    wx = jnp.sum(w * x, axis=-1, keepdims=True)              # (tn, 1)
    row_loss = lse - wx

    # Mask rows past the end of the batch (partial last tile).  Keep this as a
    # select (NOT multiply-by-mask): padded rows may hold garbage (Inf/NaN).
    row_idx = i * tile_n + jax.lax.broadcasted_iota(jnp.int32, (tn, 1), 0)
    out_ref[...] = jnp.where(row_idx < n_rows, row_loss, 0.0)


def _vmem_capacity_bytes():
    """Generation-aware VMEM capacity; conservative (v7x-sized) fallback."""
    try:
        cap = getattr(pltpu.get_tpu_info(), "vmem_capacity_bytes", None)
        if cap:
            return int(cap)
    except Exception:
        pass
    return 64 * 1024 * 1024


def _pick_tile_n(n_rows, n_classes, in_itemsize, vmem_capacity):
    """Large batch tile bounded by a VMEM budget and a >=4-grid-step cap.

    Per-row cost: double-buffered pred input + ~4 f32-sized full-row
    temporaries + lane-padded target/output blocks (double-buffered).
    """
    bytes_per_row = (2 * n_classes * in_itemsize      # pred, double-buffered
                     + 4 * n_classes * 4              # f32 compute temporaries
                     + 2 * 128 * 4                    # target (lane-padded)
                     + 2 * 128 * 4)                   # output (lane-padded)
    budget = min(48 * 1024 * 1024, max(8 * 1024 * 1024, vmem_capacity // 3))
    t = max(8, min(1024, budget // bytes_per_row))
    # Cap so the "parallel" grid axis has >= 4 steps when the batch allows:
    # on v7x (2 TensorCores) a single full-batch tile would idle one core.
    t = min(t, pl.cdiv(n_rows, 4))
    if t >= n_rows:
        return n_rows                                  # single full-batch tile
    sub = 16 if in_itemsize == 2 else 8                # sublane packing
    return max(sub, (t // sub) * sub)


def label_smoothing_loss(pred, target, *, classes, smoothing=0.0, tile_n=None):
    """Label-smoothing cross-entropy, mean over the batch.

    pred:   (N, C) float logits.  Prefer passing bf16 produced upstream (the
            kernel upcasts to f32 internally); do not cast to bf16 in a
            wrapper -- that would cost an extra HBM pass.
    target: (N,) integer class ids in [0, C).  Out-of-range targets are not
            detected (PyTorch's scatter_ would raise).
    Returns a scalar float32 loss.
    """
    N, C = pred.shape
    assert C == classes
    if classes < 2:
        raise ValueError("label smoothing requires classes >= 2")
    confidence = 1.0 - smoothing
    off_value = smoothing / (classes - 1)

    vmem_cap = _vmem_capacity_bytes()
    if tile_n is None:
        tile_n = _pick_tile_n(N, C, jnp.dtype(pred.dtype).itemsize, vmem_cap)
    tile_n = min(int(tile_n), N)
    num_tiles = pl.cdiv(N, tile_n)

    target2d = target.astype(jnp.int32).reshape(N, 1)

    kernel = functools.partial(
        _label_smoothing_kernel,
        off_value=float(off_value),
        confidence=float(confidence),
        n_rows=int(N),
        tile_n=int(tile_n),
    )

    vmem_limit = int(max(32 * 1024 * 1024,
                         min(vmem_cap // 2, 64 * 1024 * 1024)))

    row_losses = pl.pallas_call(
        kernel,
        out_shape=jax.ShapeDtypeStruct((N, 1), jnp.float32),
        grid_spec=pltpu.PrefetchScalarGridSpec(
            num_scalar_prefetch=0,
            grid=(num_tiles,),
            in_specs=[
                pl.BlockSpec((tile_n, 1), lambda i: (i, 0)),   # target
                pl.BlockSpec((tile_n, C), lambda i: (i, 0)),   # pred
            ],
            out_specs=pl.BlockSpec((tile_n, 1), lambda i: (i, 0)),
        ),
        compiler_params=pltpu.CompilerParams(
            dimension_semantics=("parallel",),          # megacore-shardable
            vmem_limit_bytes=vmem_limit,
        ),
    )(target2d, pred)

    # Tiny final reduction / mean over the batch done in JAX.
    return jnp.sum(row_losses) / jnp.float32(N)


def _reference(pred, target, classes, smoothing):
    confidence = 1.0 - smoothing
    logp = jax.nn.log_softmax(pred.astype(jnp.float32), axis=-1)
    true_dist = jnp.full_like(logp, smoothing / (classes - 1))
    true_dist = true_dist.at[jnp.arange(pred.shape[0]), target].set(confidence)
    return jnp.mean(jnp.sum(-true_dist * logp, axis=-1))


if __name__ == "__main__":
    key = jax.random.PRNGKey(0)
    k1, k2, k3, k4 = jax.random.split(key, 4)

    smoothing = 0.1

    # Test 1: small batch, auto tile (megacore cap forces >= 2 grid steps).
    N, C = 16, 128
    pred = jax.random.normal(k1, (N, C), dtype=jnp.float32)
    target = jax.random.randint(k2, (N,), 0, C, dtype=jnp.int32)
    loss = jax.block_until_ready(
        label_smoothing_loss(pred, target, classes=C, smoothing=smoothing))
    ref = jax.block_until_ready(_reference(pred, target, C, smoothing))
    assert jnp.allclose(loss, ref, rtol=1e-5, atol=1e-5), (loss, ref)

    # Test 2: batch not divisible by tile_n (exercises cdiv grid + row mask).
    N2 = 20
    pred2 = jax.random.normal(k3, (N2, C), dtype=jnp.float32)
    target2 = jax.random.randint(k4, (N2,), 0, C, dtype=jnp.int32)
    loss2 = jax.block_until_ready(
        label_smoothing_loss(pred2, target2, classes=C, smoothing=smoothing,
                             tile_n=8))
    ref2 = jax.block_until_ready(_reference(pred2, target2, C, smoothing))
    assert jnp.allclose(loss2, ref2, rtol=1e-5, atol=1e-5), (loss2, ref2)

    # Test 3: bf16 input path (half the HBM reads; f32 math in-kernel).
    pred_bf16 = pred.astype(jnp.bfloat16)
    loss3 = jax.block_until_ready(
        label_smoothing_loss(pred_bf16, target, classes=C,
                             smoothing=smoothing))
    ref3 = jax.block_until_ready(_reference(pred_bf16, target, C, smoothing))
    assert jnp.allclose(loss3, ref3, rtol=1e-4, atol=1e-4), (loss3, ref3)

    print("KERNEL_OK")
</pallas_src>

<mosaic_0001>
module attributes {stable_mosaic.version = 11 : i64} {
  func.func @_label_smoothing_kernel(%arg0: i32, %arg1: memref<8x1xi32, #tpu.memory_space<vmem>>, %arg2: memref<8x128xf32, #tpu.memory_space<vmem>>, %arg3: memref<8x1xf32, #tpu.memory_space<vmem>>) attributes {dimension_semantics = [#tpu.dimension_semantics<parallel>], iteration_bounds = array<i64: 2>, scalar_prefetch = 0 : i64, scratch_operands = 0 : i64, tpu.core_type = #tpu.core_type<tc>, window_params = [{transform_indices = @transform_0, window_bounds = array<i64: 8, 1>}, {transform_indices = @transform_1, window_bounds = array<i64: 8, 128>}, {transform_indices = @transform_2, window_bounds = array<i64: 8, 1>}]} {
    %c0 = arith.constant 0 : index
    %c0_0 = arith.constant 0 : index
    %0 = vector.load %arg2[%c0, %c0_0] : memref<8x128xf32, #tpu.memory_space<vmem>>, vector<8x128xf32>
    %cst = arith.constant dense<0xFF800000> : vector<8xf32>
    %1 = vector.multi_reduction <maximumf>, %0, %cst [1] : vector<8x128xf32> to vector<8xf32>
    %2 = vector.shape_cast %1 : vector<8xf32> to vector<8x1xf32>
    %3 = vector.broadcast %2 : vector<8x1xf32> to vector<8x128xf32>
    %4 = arith.subf %0, %3 : vector<8x128xf32>
    %5 = math.exp %4 : vector<8x128xf32>
    %cst_1 = arith.constant dense<0.000000e+00> : vector<8xf32>
    %6 = vector.multi_reduction <add>, %5, %cst_1 [1] : vector<8x128xf32> to vector<8xf32>
    %7 = vector.shape_cast %6 : vector<8xf32> to vector<8x1xf32>
    %8 = math.log %7 : vector<8x1xf32>
    %9 = arith.addf %8, %2 : vector<8x1xf32>
    %10 = tpu.iota {dimensions = array<i32: 1>} : vector<8x128xi32>
    %c0_2 = arith.constant 0 : index
    %c0_3 = arith.constant 0 : index
    %11 = vector.load %arg1[%c0_2, %c0_3] : memref<8x1xi32, #tpu.memory_space<vmem>>, vector<8x1xi32>
    %12 = vector.broadcast %11 : vector<8x1xi32> to vector<8x128xi32>
    %13 = arith.cmpi eq, %10, %12 : vector<8x128xi32>
    %cst_4 = arith.constant 0.899999976 : f32
    %cst_5 = arith.constant 7.87401571E-4 : f32
    %14 = vector.broadcast %cst_4 : f32 to vector<8x128xf32>
    %15 = vector.broadcast %cst_5 : f32 to vector<8x128xf32>
    %16 = arith.select %13, %14, %15 : vector<8x128xi1>, vector<8x128xf32>
    %17 = arith.mulf %16, %0 : vector<8x128xf32>
    %cst_6 = arith.constant dense<0.000000e+00> : vector<8xf32>
    %18 = vector.multi_reduction <add>, %17, %cst_6 [1] : vector<8x128xf32> to vector<8xf32>
    %19 = vector.shape_cast %18 : vector<8xf32> to vector<8x1xf32>
    %20 = arith.subf %9, %19 : vector<8x1xf32>
    %c8_i32 = arith.constant 8 : i32
    %21 = arith.muli %arg0, %c8_i32 : i32
    %22 = tpu.iota {dimensions = array<i32: 0>} : vector<8x1xi32>
    %23 = vector.broadcast %21 : i32 to vector<8x1xi32>
    %24 = arith.addi %23, %22 : vector<8x1xi32>
    %c16_i32 = arith.constant 16 : i32
    %25 = vector.broadcast %c16_i32 : i32 to vector<8x1xi32>
    %26 = arith.cmpi slt, %24, %25 : vector<8x1xi32>
    %cst_7 = arith.constant 0.000000e+00 : f32
    %27 = vector.broadcast %cst_7 : f32 to vector<8x1xf32>
    %28 = arith.select %26, %20, %27 : vector<8x1xi1>, vector<8x1xf32>
    %c0_8 = arith.constant 0 : index
    %c0_9 = arith.constant 0 : index
    %29 = vector.load %arg3[%c0_8, %c0_9] : memref<8x1xf32, #tpu.memory_space<vmem>>, vector<8x1xf32>
    tpu.vector_store %arg3[%c0_8, %c0_9], %28 {strides = array<i32>} : memref<8x1xf32, #tpu.memory_space<vmem>>, vector<8x1xf32>,
    return
  }
  func.func @transform_0(%arg0: i32) -> (i32, i32) {
    %c0_i32 = arith.constant 0 : i32
    %c0_i32_0 = arith.constant 0 : i32
    return %arg0, %c0_i32 : i32, i32
  }
  func.func @transform_1(%arg0: i32) -> (i32, i32) {
    %c0_i32 = arith.constant 0 : i32
    %c0_i32_0 = arith.constant 0 : i32
    return %arg0, %c0_i32 : i32, i32
  }
  func.func @transform_2(%arg0: i32) -> (i32, i32) {
    %c0_i32 = arith.constant 0 : i32
    %c0_i32_0 = arith.constant 0 : i32
    return %arg0, %c0_i32 : i32, i32
  }
}

</mosaic_0001>

<llo_original>
// kernel: tpu_custom_call.1
$region0: #{tpu_custom_call.1}
  #allocation0 [shape = 'u32[]', space=smem, size = 0x4, offset = 0x4, fixed_abs, tag = 'smem constant byte address 0x4 - core index']
  #allocation1 [shape = 'u32[144,128]{1,0:T(1,128)}', space=vmem, size = 0x12000, scoped, tag = 'internal scratch']
  %s0 = inlined_call_operand.vmem [shape: s32[16,1], index: 0, kind: input, shape index: {}]
  %s1 = inlined_call_operand.vmem [shape: f32[16,128], index: 1, kind: input, shape index: {}]
  %s2 = inlined_call_operand.vmem [shape: f32[16,1], index: 2, kind: output, shape index: {}]
  %s3 = sld [smem:[#allocation0]]
  $region41: #{tpu_custom_call.1} parent=0
    _
  %s5 = ssub.s32 1, %s3
  %s6 = scalar_select 0, %s5, %s3
  loop: start=0, step=1, limit=4
  $region2: #{tpu_custom_call.1} parent=0 // loop_pre_header
    _
  $region3: #{tpu_custom_call.1} parent=0 // loop_header
    %s8 = sphi 0, %s12
    %p9 = scmp.ge.s32.totalorder %s8, 4
    %s18 = sphi 0, %s20
    %s21 = sphi 0, %s18
    %s22 = sphi 0, %s21
    %s38 = sphi 0, %s22
    %s44 = sphi 0, %s46
    %s47 = sphi 0, %s44
    %s48 = sphi 0, %s47
    %s64 = sphi 0, %s48
    %s70 = sphi 0, %s72
    %s73 = sphi 0, %s70
    %s74 = sphi 0, %s73
    %s90 = sphi 0, %s74
  $region4: #{tpu_custom_call.1} parent=0 // loop_header_branch
    %11 = sbr.rel (%p9) target = $region8
  $region5: #{tpu_custom_call.1} parent=0 // loop_body
    %s13 = ssub.s32 %s8, 1
    %s14 = ssub.s32 %s8, 2
    %s15 = sadd.s32 %s8, 1
    %s16 = ssub.s32 %s8, %s15
    %p17 = scmp.eq.s32.totalorder %s16, 0
    %s19 = sadd.s32 %s18, 1
    %s20 = scalar_select %p17, %s18, %s19
    %p23 = pneg %p17
    %p24 = scmp.eq.s32.totalorder %s8, 1
    %p25 = por %p23, %p24
    %p26 = scmp.ne.s32.totalorder %s18, %s21
    %p27 = scmp.eq.s32.totalorder %s8, 0
    %p28 = por %p26, %p27
    %p29 = scmp.ne.s32.totalorder %s18, %s21
    %p30 = scmp.eq.s32.totalorder %s13, 1
    %p31 = por %p29, %p30
    %p32 = scmp.ne.s32.totalorder %s21, %s22
    %p33 = scmp.eq.s32.totalorder %s13, 0
    %p34 = por %p32, %p33
    %p35 = scmp.ne.s32.totalorder %s21, %s22
    %p36 = scmp.eq.s32.totalorder %s14, 1
    %p37 = por %p35, %p36
    %p39 = scmp.ne.s32.totalorder %s22, %s38
    %p40 = scmp.eq.s32.totalorder %s14, 0
    %p41 = por %p39, %p40
    %s42 = ssub.s32 %s8, %s15
    %p43 = scmp.eq.s32.totalorder %s42, 0
    %s45 = sadd.s32 %s44, 1
    %s46 = scalar_select %p43, %s44, %s45
    %p49 = pneg %p43
    %p50 = scmp.eq.s32.totalorder %s8, 1
    %p51 = por %p49, %p50
    %p52 = scmp.ne.s32.totalorder %s44, %s47
    %p53 = scmp.eq.s32.totalorder %s8, 0
    %p54 = por %p52, %p53
    %p55 = scmp.ne.s32.totalorder %s44, %s47
    %p56 = scmp.eq.s32.totalorder %s13, 1
    %p57 = por %p55, %p56
    %p58 = scmp.ne.s32.totalorder %s47, %s48
    %p59 = scmp.eq.s32.totalorder %s13, 0
    %p60 = por %p58, %p59
    %p61 = scmp.ne.s32.totalorder %s47, %s48
    %p62 = scmp.eq.s32.totalorder %s14, 1
    %p63 = por %p61, %p62
    %p65 = scmp.ne.s32.totalorder %s48, %s64
    %p66 = scmp.eq.s32.totalorder %s14, 0
    %p67 = por %p65, %p66
    %s68 = ssub.s32 %s8, %s15
    %p69 = scmp.eq.s32.totalorder %s68, 0
    %s71 = sadd.s32 %s70, 1
    %s72 = scalar_select %p69, %s70, %s71
    %p75 = pneg %p69
    %p76 = scmp.eq.s32.totalorder %s8, 1
    %p77 = por %p75, %p76
    %p78 = scmp.ne.s32.totalorder %s70, %s73
    %p79 = scmp.eq.s32.totalorder %s8, 0
    %p80 = por %p78, %p79
    %p81 = scmp.ne.s32.totalorder %s70, %s73
    %p82 = scmp.eq.s32.totalorder %s13, 1
    %p83 = por %p81, %p82
    %p84 = scmp.ne.s32.totalorder %s73, %s74
    %p85 = scmp.eq.s32.totalorder %s13, 0
    %p86 = por %p84, %p85
    %p87 = scmp.ne.s32.totalorder %s73, %s74
    %p88 = scmp.eq.s32.totalorder %s14, 1
    %p89 = por %p87, %p88
    %p91 = scmp.ne.s32.totalorder %s74, %s90
    %p92 = scmp.eq.s32.totalorder %s14, 0
    %p93 = por %p91, %p92
    %p94 = scmp.le.s32.totalorder 1, %s8
    %p95 = scmp.lt.s32.totalorder %s8, 3
    %p96 = pnand %p94, %p95
    %p97 = pneg %p96
    // Predicated region
    $region9: #{tpu_custom_call.1} parent=5 // pred_check
      _
    $region10: #{tpu_custom_call.1} parent=5 // pred_check_branch
      %99 = sbr.rel (%p96) target = $region12
    $region11: #{tpu_custom_call.1} parent=5 // pred_region
      %s100 = ssub.s32 %s8, 1
    $region12: #{tpu_custom_call.1} parent=5 // pred_fallthru
      _
    %p101 = scmp.lt.s32.totalorder %s8, 2
    // Predicated region
    $region13: #{tpu_custom_call.1} parent=5 // pred_check
      %p102 = pneg %p101
    $region14: #{tpu_custom_call.1} parent=5 // pred_check_branch
      %104 = sbr.rel (%p102) target = $region16
    $region15: #{tpu_custom_call.1} parent=5 // pred_region
      // Predicated region
      $region17: #{tpu_custom_call.1} parent=15 // pred_check
        %p105 = pneg %p28
      $region18: #{tpu_custom_call.1} parent=15 // pred_check_branch
        %107 = sbr.rel (%p105) target = $region20
      $region19: #{tpu_custom_call.1} parent=15 // pred_region
        %p108 = scmp.lt.s32.totalorder %s8, 1
        %s109 = scalar_select %p108, %s8, 1
        %s110 = smul.addr %s109, 8
        %s111 = scalar_lea.vmem %s0, %s110
      $region20: #{tpu_custom_call.1} parent=15 // pred_fallthru
        _
      // Predicated region
      $region21: #{tpu_custom_call.1} parent=15 // pred_check
        %p112 = pneg %p54
      $region22: #{tpu_custom_call.1} parent=15 // pred_check_branch
        %114 = sbr.rel (%p112) target = $region24
      $region23: #{tpu_custom_call.1} parent=15 // pred_region
        %p115 = scmp.lt.s32.totalorder %s8, 1
        %s116 = scalar_select %p115, %s8, 1
        %s117 = smul.addr %s116, 8
        %s118 = scalar_lea.vmem %s1, %s117
      $region24: #{tpu_custom_call.1} parent=15 // pred_fallthru
        _
    $region16: #{tpu_custom_call.1} parent=5 // pred_fallthru
      _
    %p119 = scmp.le.s32.totalorder 1, %s8
    %p120 = scmp.lt.s32.totalorder %s8, 3
    %p121 = pnand %p119, %p120
    %p122 = pneg %p121
    // Predicated region
    $region25: #{tpu_custom_call.1} parent=5 // pred_check
      _
    $region26: #{tpu_custom_call.1} parent=5 // pred_check_branch
      %124 = sbr.rel (%p121) target = $region28
    $region27: #{tpu_custom_call.1} parent=5 // pred_region
      %s125 = ssub.s32 %s8, 1
      %p126 = scmp.lt.s32.totalorder %s13, 1
      %s127 = scalar_select %p126, %s13, 1
      %s128 = smul.addr %s127, 8
      %s129 = scalar_lea.vmem %s0, %s128
      %p130 = pneg %p34
      %p131 = pneg %p31
      %p132 = scmp.lt.s32.totalorder %s13, 1
      %s133 = scalar_select %p132, %s13, 1
      %s134 = smul.addr %s133, 8
      %s135 = scalar_lea.vmem %s1, %s134
      %p136 = pneg %p60
      %p137 = pneg %p57
      %p138 = pneg %p86
      %p139 = pneg %p83
      %p140 = scmp.lt.s32.totalorder %s13, 1
      %s141 = scalar_select %p140, %s13, 1
      %s142 = smul.addr %s141, 8
      %s143 = scalar_lea.vmem %s2, %s142
      %p144 = scmp.lt.s32.totalorder %s13, 1
      %s145 = scalar_select %p144, %s13, 1
      %s146 = smul.addr %s145, 8
      %s147 = scalar_lea.vmem %s0, %s146
      %p148 = scmp.lt.s32.totalorder %s13, 1
      %s149 = scalar_select %p148, %s13, 1
      %s150 = smul.addr %s149, 8
      %s151 = scalar_lea.vmem %s1, %s150
      %p152 = scmp.lt.s32.totalorder %s13, 1
      %s153 = scalar_select %p152, %s13, 1
      %s154 = smul.addr %s153, 8
      %s155 = scalar_lea.vmem %s2, %s154
      %v156 = vld [vmem:[%s151] sm:$0xff]
      %157 = vmax.xlane.f32.xlu0 %v156
      %v158 = vpop.xlane.xlu0 %157
      %v159 = vsub.f32 %v156, %v158
      %v160 = vmul.f32 %v159, 1.442695
      %v161 = vpow.pop %v160
      %162 = vadd.xlane.f32.xlu0 %v161
      %v163 = vpop.xlane.xlu0 %162
      %v164 = vlog2.pop %v163
      %v165 = vmul.f32 %v164, 0.6931472
      %v166 = vadd.f32 %v165, %v158
      %v167 = vlaneseq
      %v168 = vand.u32 %v167, 127
      %v169 = vld [vmem:[%s147] sm:$0xff]
      %170 = vset.pattern.permute.xlu0 0
      %171 = vperm.xlu0 %170, %v169
      %v172 = vpop.permute.xlu0 %171
      %vm173 = vcmp.eq.s32.totalorder %v168, %v172
      %v174 = vsel %vm173, 0.9, 0.0007874016
      %v175 = vmul.f32 %v174, %v156
      %176 = vadd.xlane.f32.xlu0 %v175
      %v177 = vpop.xlane.xlu0 %176
      %v178 = vsub.f32 %v166, %v177
      %s179 = smul.u32 %s13, 8
      %v180 = vlaneseq
      %v181 = vshrl.u32 %v180, 7
      %v182 = vstv %s179
      %v183 = vadd.s32 %v182, %v181
      %vm184 = vcmp.lt.s32.totalorder %v183, 16
      %v185 = vsel %vm184, %v178, 0.0
      %vm186 = vcmask 7168
      %187 = vst.msk [vmem:[%s155] sm:$0xff] %vm186, %v185
      %p188 = scmp.lt.s32.totalorder %s13, 1
      %s189 = scalar_select %p188, %s13, 1
      %s190 = smul.addr %s189, 8
      %s191 = scalar_lea.vmem %s2, %s190
      // Predicated region
      $region29: #{tpu_custom_call.1} parent=27 // pred_check
        %p192 = pneg %p83
      $region30: #{tpu_custom_call.1} parent=27 // pred_check_branch
        %194 = sbr.rel (%p192) target = $region32
      $region31: #{tpu_custom_call.1} parent=27 // pred_region
        _
      $region32: #{tpu_custom_call.1} parent=27 // pred_fallthru
        _
    $region28: #{tpu_custom_call.1} parent=5 // pred_fallthru
      _
    %p195 = scmp.le.s32.totalorder 2, %s8
    // Predicated region
    $region33: #{tpu_custom_call.1} parent=5 // pred_check
      %p196 = pneg %p195
    $region34: #{tpu_custom_call.1} parent=5 // pred_check_branch
      %198 = sbr.rel (%p196) target = $region36
    $region35: #{tpu_custom_call.1} parent=5 // pred_region
      %s199 = ssub.s32 %s8, 2
      // Predicated region
      $region37: #{tpu_custom_call.1} parent=35 // pred_check
        %p200 = pneg %p89
      $region38: #{tpu_custom_call.1} parent=35 // pred_check_branch
        %202 = sbr.rel (%p200) target = $region40
      $region39: #{tpu_custom_call.1} parent=35 // pred_region
        %p203 = scmp.lt.s32.totalorder %s14, 1
        %s204 = scalar_select %p203, %s14, 1
        %s205 = smul.addr %s204, 8
        %s206 = scalar_lea.vmem %s2, %s205
      $region40: #{tpu_custom_call.1} parent=35 // pred_fallthru
        _
    $region36: #{tpu_custom_call.1} parent=5 // pred_fallthru
      _
  $region6: #{tpu_custom_call.1} parent=0 // loop_footer
    %s12 = sadd.s32 1, %s8
  $region7: #{tpu_custom_call.1} parent=0 // loop_footer_branch
    %7 = sbr.rel target = $region3
  $region8: #{tpu_custom_call.1} parent=0 // loop_exit
    _

</llo_original>
